<compile_context>
chip_gen: v7x
topology: tpu7x:2x2x1
jax: 0.10.0
libtpu: 0.0.40
codegen_flags: <defaults>
</compile_context>

<pallas_src>
import functools

import jax
import jax.numpy as jnp
from jax.experimental import pallas as pl
from jax.experimental.pallas import tpu as pltpu

_MIB = 1024 * 1024


def _vmem_capacity_bytes():
    """Physical per-core VMEM, with a conservative (v7x-safe) fallback."""
    try:
        cap = getattr(pltpu.get_tpu_info(), "vmem_capacity_bytes", None)
        if cap:
            return int(cap)
    except Exception:
        pass
    return 64 * _MIB


def _budgets():
    """(max streamed block bytes, vmem_limit_bytes), tuned per generation.

    v5e/v6e (128 MiB VMEM) -> ~12 MiB blocks under a 96 MiB limit.
    v7x     (64 MiB / TC)  -> ~6 MiB blocks under a 48 MiB limit.
    """
    cap = _vmem_capacity_bytes()
    vmem_limit = min(96 * _MIB, max(32 * _MIB, (cap * 3) // 4))
    # <= 4 resident block buffers (2 in + 2 out) + weights + compiler scratch.
    block_budget = max(4 * _MIB, min(12 * _MIB, vmem_limit // 8))
    return block_budget, vmem_limit


def _choose_batches_per_step(n, per_image_bytes, max_block_bytes):
    """Largest divisor of n whose block fits the budget, biased toward an even
    number of grid steps so v7x megacore can split the 'parallel' axis."""
    fits = [d for d in range(1, n + 1)
            if n % d == 0 and d * per_image_bytes <= max_block_bytes]
    if not fits:
        return 1
    even_steps = [d for d in fits if (n // d) % 2 == 0]
    if even_steps:
        return max(even_steps)
    multi_step = [d for d in fits if n // d >= 2]
    return max(multi_step) if multi_step else max(fits)


def _choose_hw_tile(hw, c, itemsize, max_block_bytes):
    """Largest 128-multiple divisor of hw whose (1, C, tile) block fits the
    budget (lane-dense and (8,128)-legal).  None if no such tile exists."""
    best = None
    for t in range(128, hw, 128):
        if hw % t == 0 and c * t * itemsize <= max_block_bytes:
            best = t
    return best


# --------------------------------------------------------------------------
# Kernels
# --------------------------------------------------------------------------
def _se_fused_kernel(x_ref, w1t_ref, b1_ref, w2t_ref, b2_ref, y_ref):
    """Fused single pass: (Nb, C, HW) block -> pool -> MXU FCs -> rescale."""
    x = x_ref[...]
    pooled = jnp.mean(x, axis=-1)                                     # (Nb, C)
    # Excitation MLP on the MXU (otherwise idle; no (Nb, C_r, C) intermediate).
    h = jnp.dot(pooled, w1t_ref[...], preferred_element_type=jnp.float32)
    h = jnp.maximum(h + b1_ref[...], 0.0)                             # (Nb, C_r)
    s = jnp.dot(h, w2t_ref[...], preferred_element_type=jnp.float32)
    s = jax.nn.sigmoid(s + b2_ref[...])                               # (Nb, C)
    y_ref[...] = (x * s[:, :, None]).astype(y_ref.dtype)


def _se_scale_kernel(x_ref, w1t_ref, b1_ref, w2t_ref, b2_ref, s_ref, *, inv_hw):
    """Phase 1 of the HW-tiled path: accumulate the pooled sum over the
    'arbitrary' HW grid axis, finalize to the per-channel sigmoid scale."""
    hw_i = pl.program_id(1)

    @pl.when(hw_i == 0)
    def _init():
        s_ref[...] = jnp.zeros_like(s_ref)

    s_ref[...] += jnp.sum(x_ref[...], axis=-1, keepdims=True)         # (1, C, 1)

    @pl.when(hw_i == pl.num_programs(1) - 1)
    def _finalize():
        pooled = s_ref[...][:, :, 0] * inv_hw                         # (1, C)
        h = jnp.dot(pooled, w1t_ref[...], preferred_element_type=jnp.float32)
        h = jnp.maximum(h + b1_ref[...], 0.0)
        s = jnp.dot(h, w2t_ref[...], preferred_element_type=jnp.float32)
        s = jax.nn.sigmoid(s + b2_ref[...])
        s_ref[...] = s[:, :, None]


def _se_rescale_kernel(x_ref, s_ref, y_ref):
    """Phase 2 of the HW-tiled path: y = x * scale, parallel over (N, HW)."""
    y_ref[...] = (x_ref[...] * s_ref[...]).astype(y_ref.dtype)


# --------------------------------------------------------------------------
# Wrapper
# --------------------------------------------------------------------------
def se_block(x, w1, b1, w2, b2, *, max_block_bytes=None):
    """SEBlock forward.  x: (N, C, H, W) f32; w1: (C_r, C); b1: (C_r,);
    w2: (C, C_r); b2: (C,).  Returns (N, C, H, W)."""
    N, C, H, W = x.shape
    HW = H * W
    C_r = w1.shape[0]
    itemsize = jnp.dtype(x.dtype).itemsize

    block_budget, vmem_limit = _budgets()
    if max_block_bytes is not None:
        block_budget = int(max_block_bytes)

    # NCHW kept end to end (no wrapper transposes: those re-read/re-write the
    # whole tensor through HBM).  Spatial sits on lanes.
    # TODO(synk): a caller holding NHWC activations could use a channels-on-
    # lanes variant of the same kernel for fully unmasked stores.
    x_flat = x.reshape(N, C, HW)
    w1t = jnp.transpose(w1)                      # (C, C_r)  -- tiny
    w2t = jnp.transpose(w2)                      # (C_r, C)
    b1r = b1.reshape(1, C_r)
    b2r = b2.reshape(1, C)

    per_image_bytes = C * HW * itemsize
    if per_image_bytes <= block_budget:
        nb = _choose_batches_per_step(N, per_image_bytes, block_budget)
        hw_tile = None
    else:
        # Single image exceeds the budget: try the HW-tiled two-phase path.
        # If HW has no 128-multiple divisor that fits, accept one big block
        # per image (default double-buffering) as long as the limit allows.
        nb = 1
        hw_tile = _choose_hw_tile(HW, C, itemsize, block_budget)

    cost = pl.CostEstimate(
        flops=3 * N * C * HW + 4 * N * C * C_r,          # pool + rescale + FCs
        transcendentals=N * C,                           # sigmoid
        bytes_accessed=2 * N * C * HW * itemsize
        + (w1.size + b1.size + w2.size + b2.size) * itemsize,
    )

    if hw_tile is None:
        # ---------------- fused single pass ----------------
        block = (nb, C, HW)
        y_flat = pl.pallas_call(
            _se_fused_kernel,
            out_shape=jax.ShapeDtypeStruct((N, C, HW), x.dtype),
            grid_spec=pltpu.PrefetchScalarGridSpec(
                num_scalar_prefetch=0,
                grid=(N // nb,),
                in_specs=[
                    pl.BlockSpec(block, lambda n: (n, 0, 0)),
                    pl.BlockSpec((C, C_r), lambda n: (0, 0)),
                    pl.BlockSpec((1, C_r), lambda n: (0, 0)),
                    pl.BlockSpec((C_r, C), lambda n: (0, 0)),
                    pl.BlockSpec((1, C), lambda n: (0, 0)),
                ],
                out_specs=pl.BlockSpec(block, lambda n: (n, 0, 0)),
            ),
            compiler_params=pltpu.CompilerParams(
                dimension_semantics=("parallel",),
                vmem_limit_bytes=vmem_limit,
            ),
            cost_estimate=cost,
        )(x_flat, w1t, b1r, w2t, b2r)
    else:
        # ---------------- two-phase HW-tiled fallback ----------------
        n_hw = HW // hw_tile
        x_block = (1, C, hw_tile)

        scale = pl.pallas_call(
            functools.partial(_se_scale_kernel, inv_hw=1.0 / HW),
            out_shape=jax.ShapeDtypeStruct((N, C, 1), jnp.float32),
            grid_spec=pltpu.PrefetchScalarGridSpec(
                num_scalar_prefetch=0,
                grid=(N, n_hw),
                in_specs=[
                    pl.BlockSpec(x_block, lambda n, h: (n, 0, h)),
                    pl.BlockSpec((C, C_r), lambda n, h: (0, 0)),
                    pl.BlockSpec((1, C_r), lambda n, h: (0, 0)),
                    pl.BlockSpec((C_r, C), lambda n, h: (0, 0)),
                    pl.BlockSpec((1, C), lambda n, h: (0, 0)),
                ],
                out_specs=pl.BlockSpec((1, C, 1), lambda n, h: (n, 0, 0)),
            ),
            compiler_params=pltpu.CompilerParams(
                dimension_semantics=("parallel", "arbitrary"),
                vmem_limit_bytes=vmem_limit,
            ),
        )(x_flat, w1t, b1r, w2t, b2r)

        y_flat = pl.pallas_call(
            _se_rescale_kernel,
            out_shape=jax.ShapeDtypeStruct((N, C, HW), x.dtype),
            grid_spec=pltpu.PrefetchScalarGridSpec(
                num_scalar_prefetch=0,
                grid=(N, n_hw),
                in_specs=[
                    pl.BlockSpec(x_block, lambda n, h: (n, 0, h)),
                    pl.BlockSpec((1, C, 1), lambda n, h: (n, 0, 0)),
                ],
                out_specs=pl.BlockSpec(x_block, lambda n, h: (n, 0, h)),
            ),
            compiler_params=pltpu.CompilerParams(
                dimension_semantics=("parallel", "parallel"),
                vmem_limit_bytes=vmem_limit,
            ),
            cost_estimate=cost,
        )(x_flat, scale)

    return y_flat.reshape(N, C, H, W)


# --------------------------------------------------------------------------
# Reference + tests
# --------------------------------------------------------------------------
def se_block_ref(x, w1, b1, w2, b2):
    """Pure-JAX reference mirroring the PyTorch module."""
    pooled = jnp.mean(x, axis=(2, 3))                           # (N, C)
    h = jnp.maximum(pooled @ w1.T + b1, 0.0)                    # (N, C_r)
    s = jax.nn.sigmoid(h @ w2.T + b2)                           # (N, C)
    return x * s[:, :, None, None]


def _run_case(key, N, C, H, W, reduction, max_block_bytes=None):
    C_r = max(C // reduction, 1)
    kx, k1, k2, k3, k4 = jax.random.split(key, 5)
    x = jax.random.normal(kx, (N, C, H, W), dtype=jnp.float32)
    # Conv2d 1x1 on a (C,1,1) tensor == dense layer with weight (out, in).
    w1 = jax.random.normal(k1, (C_r, C), dtype=jnp.float32) * 0.1
    b1 = jax.random.normal(k2, (C_r,), dtype=jnp.float32) * 0.1
    w2 = jax.random.normal(k3, (C, C_r), dtype=jnp.float32) * 0.1
    b2 = jax.random.normal(k4, (C,), dtype=jnp.float32) * 0.1

    y = jax.block_until_ready(
        se_block(x, w1, b1, w2, b2, max_block_bytes=max_block_bytes))
    y_ref = se_block_ref(x, w1, b1, w2, b2)
    assert y.shape == x.shape
    # The excitation FCs run on the MXU (bf16-pass precision), so allow a
    # slightly looser tolerance than the pure-f32 VPU path would need.
    err = float(jnp.max(jnp.abs(y - y_ref)))
    assert jnp.allclose(y, y_ref, atol=1e-3, rtol=1e-3), \
        f"mismatch vs reference for shape {(N, C, H, W)}: max abs err {err}"


if __name__ == "__main__":
    key = jax.random.PRNGKey(0)
    k_a, k_b, k_c = jax.random.split(key, 3)
    # Fused path, lane-dense spatial axis (HW = 256).
    _run_case(k_a, N=2, C=32, H=16, W=16, reduction=16)
    # Fused path with non-128-aligned HW (7x7): NCHW kept, no wrapper transposes.
    _run_case(k_b, N=2, C=128, H=7, W=7, reduction=16)
    # Two-phase HW-tiled fallback (forced by shrinking the block budget).
    _run_case(k_c, N=2, C=32, H=16, W=16, reduction=16, max_block_bytes=16 * 1024)
    print("KERNEL_OK")
</pallas_src>

<mosaic_0001>
module attributes {stable_mosaic.version = 11 : i64} {
  func.func @_se_fused_kernel(%arg0: i32, %arg1: memref<1x32x256xf32, #tpu.memory_space<vmem>>, %arg2: memref<32x2xf32, #tpu.memory_space<vmem>>, %arg3: memref<1x2xf32, #tpu.memory_space<vmem>>, %arg4: memref<2x32xf32, #tpu.memory_space<vmem>>, %arg5: memref<1x32xf32, #tpu.memory_space<vmem>>, %arg6: memref<1x32x256xf32, #tpu.memory_space<vmem>>) attributes {dimension_semantics = [#tpu.dimension_semantics<parallel>], iteration_bounds = array<i64: 2>, scalar_prefetch = 0 : i64, scratch_operands = 0 : i64, tpu.core_type = #tpu.core_type<tc>, window_params = [{transform_indices = @transform_0, window_bounds = array<i64: 1, 32, 256>}, {pipeline_mode = #tpu.pipeline_mode<synchronous>, transform_indices = @transform_1, window_bounds = array<i64: 32, 2>}, {pipeline_mode = #tpu.pipeline_mode<synchronous>, transform_indices = @transform_2, window_bounds = array<i64: 1, 2>}, {pipeline_mode = #tpu.pipeline_mode<synchronous>, transform_indices = @transform_3, window_bounds = array<i64: 2, 32>}, {pipeline_mode = #tpu.pipeline_mode<synchronous>, transform_indices = @transform_4, window_bounds = array<i64: 1, 32>}, {transform_indices = @transform_5, window_bounds = array<i64: 1, 32, 256>}]} {
    %c0 = arith.constant 0 : index
    %c0_0 = arith.constant 0 : index
    %c0_1 = arith.constant 0 : index
    %0 = vector.load %arg1[%c0, %c0_0, %c0_1] : memref<1x32x256xf32, #tpu.memory_space<vmem>>, vector<1x32x256xf32>
    %cst = arith.constant dense<0.000000e+00> : vector<1x32xf32>
    %1 = vector.multi_reduction <add>, %0, %cst [2] : vector<1x32x256xf32> to vector<1x32xf32>
    %cst_2 = arith.constant 2.560000e+02 : f32
    %2 = vector.broadcast %cst_2 : f32 to vector<1x32xf32>
    %3 = arith.divf %1, %2 : vector<1x32xf32>
    %c0_3 = arith.constant 0 : index
    %c0_4 = arith.constant 0 : index
    %4 = vector.load %arg2[%c0_3, %c0_4] : memref<32x2xf32, #tpu.memory_space<vmem>>, vector<32x2xf32>
    %cst_5 = arith.constant dense<0.000000e+00> : vector<1x2xf32>
    %5 = tpu.matmul %3, %4, %cst_5 {dimension_numbers = #tpu.dot_dimension_numbers<[1], [0], [0], [1], [0, 0, 1, 1], [], []>} : vector<1x32xf32>, vector<32x2xf32>, vector<1x2xf32> -> vector<1x2xf32>
    %c0_6 = arith.constant 0 : index
    %c0_7 = arith.constant 0 : index
    %6 = vector.load %arg3[%c0_6, %c0_7] : memref<1x2xf32, #tpu.memory_space<vmem>>, vector<1x2xf32>
    %7 = arith.addf %5, %6 : vector<1x2xf32>
    %cst_8 = arith.constant 0.000000e+00 : f32
    %8 = vector.broadcast %cst_8 : f32 to vector<1x2xf32>
    %9 = arith.maximumf %7, %8 : vector<1x2xf32>
    %c0_9 = arith.constant 0 : index
    %c0_10 = arith.constant 0 : index
    %10 = vector.load %arg4[%c0_9, %c0_10] : memref<2x32xf32, #tpu.memory_space<vmem>>, vector<2x32xf32>
    %cst_11 = arith.constant dense<0.000000e+00> : vector<1x32xf32>
    %11 = tpu.matmul %9, %10, %cst_11 {dimension_numbers = #tpu.dot_dimension_numbers<[1], [0], [0], [1], [0, 0, 1, 1], [], []>} : vector<1x2xf32>, vector<2x32xf32>, vector<1x32xf32> -> vector<1x32xf32>
    %c0_12 = arith.constant 0 : index
    %c0_13 = arith.constant 0 : index
    %12 = vector.load %arg5[%c0_12, %c0_13] : memref<1x32xf32, #tpu.memory_space<vmem>>, vector<1x32xf32>
    %13 = arith.addf %11, %12 : vector<1x32xf32>
    %14 = arith.negf %13 : vector<1x32xf32>
    %15 = math.exp %14 : vector<1x32xf32>
    %cst_14 = arith.constant 1.000000e+00 : f32
    %16 = vector.broadcast %cst_14 : f32 to vector<1x32xf32>
    %17 = arith.addf %16, %15 : vector<1x32xf32>
    %18 = arith.divf %16, %17 : vector<1x32xf32>
    %19 = vector.shape_cast %18 : vector<1x32xf32> to vector<1x32x1xf32>
    %20 = vector.broadcast %19 : vector<1x32x1xf32> to vector<1x32x256xf32>
    %21 = arith.mulf %0, %20 : vector<1x32x256xf32>
    %c0_15 = arith.constant 0 : index
    %c0_16 = arith.constant 0 : index
    %c0_17 = arith.constant 0 : index
    %22 = vector.load %arg6[%c0_15, %c0_16, %c0_17] : memref<1x32x256xf32, #tpu.memory_space<vmem>>, vector<1x32x256xf32>
    tpu.vector_store %arg6[%c0_15, %c0_16, %c0_17], %21 {strides = array<i32>} : memref<1x32x256xf32, #tpu.memory_space<vmem>>, vector<1x32x256xf32>,
    return
  }
  func.func @transform_0(%arg0: i32) -> (i32, i32, i32) {
    %c0_i32 = arith.constant 0 : i32
    %c0_i32_0 = arith.constant 0 : i32
    %c0_i32_1 = arith.constant 0 : i32
    return %arg0, %c0_i32, %c0_i32_0 : i32, i32, i32
  }
  func.func @transform_1(%arg0: i32) -> (i32, i32) {
    %c0_i32 = arith.constant 0 : i32
    %c0_i32_0 = arith.constant 0 : i32
    %c0_i32_1 = arith.constant 0 : i32
    return %c0_i32, %c0_i32_0 : i32, i32
  }
  func.func @transform_2(%arg0: i32) -> (i32, i32) {
    %c0_i32 = arith.constant 0 : i32
    %c0_i32_0 = arith.constant 0 : i32
    %c0_i32_1 = arith.constant 0 : i32
    return %c0_i32, %c0_i32_0 : i32, i32
  }
  func.func @transform_3(%arg0: i32) -> (i32, i32) {
    %c0_i32 = arith.constant 0 : i32
    %c0_i32_0 = arith.constant 0 : i32
    %c0_i32_1 = arith.constant 0 : i32
    return %c0_i32, %c0_i32_0 : i32, i32
  }
  func.func @transform_4(%arg0: i32) -> (i32, i32) {
    %c0_i32 = arith.constant 0 : i32
    %c0_i32_0 = arith.constant 0 : i32
    %c0_i32_1 = arith.constant 0 : i32
    return %c0_i32, %c0_i32_0 : i32, i32
  }
  func.func @transform_5(%arg0: i32) -> (i32, i32, i32) {
    %c0_i32 = arith.constant 0 : i32
    %c0_i32_0 = arith.constant 0 : i32
    %c0_i32_1 = arith.constant 0 : i32
    return %arg0, %c0_i32, %c0_i32_0 : i32, i32, i32
  }
}

</mosaic_0001>

<llo_original>
// kernel: tpu_custom_call.1
$region0: #{tpu_custom_call.1}
  #allocation0 [shape = 'u32[]', space=smem, size = 0x4, offset = 0x4, fixed_abs, tag = 'smem constant byte address 0x4 - core index']
  #allocation1 [shape = 'u32[144,128]{1,0:T(1,128)}', space=vmem, size = 0x12000, scoped, tag = 'internal scratch']
  %s0 = inlined_call_operand.hbm [shape: f32[2,32,256], index: 0, kind: input, shape index: {}]
  %s1 = inlined_call_operand.vmem [shape: f32[32,2], index: 1, kind: input, shape index: {}]
  %s2 = inlined_call_operand.vmem [shape: f32[1,2], index: 2, kind: input, shape index: {}]
  %s3 = inlined_call_operand.vmem [shape: f32[2,32], index: 3, kind: input, shape index: {}]
  %s4 = inlined_call_operand.vmem [shape: f32[1,32], index: 4, kind: input, shape index: {}]
  %s5 = inlined_call_operand.hbm [shape: f32[2,32,256], index: 5, kind: output, shape index: {}]
  %s6 = sld [smem:[#allocation0]]
  $region57: #{tpu_custom_call.1} parent=0
    _
  %s8 = ssub.s32 1, %s6
  %s9 = scalar_select 0, %s8, %s6
  $region1: #{tpu_custom_call.1} parent=0
    #allocation2 [shape = 'u8[65536]{0}', space=vmem, size = 0x10000, scoped, tag = 'input window, operand 0']
    #allocation3 [shape = 's32[2]{0}', space=sflag, size = 0x8, scoped, tag = 'scoped memory for tpu_custom_call.1']
    #allocation4 [shape = 's32[2]{0}', space=sflag, size = 0x8, scoped, tag = 'scoped memory for tpu_custom_call.1']
    #allocation5 [shape = 'u8[65536]{0}', space=vmem, size = 0x10000, scoped, tag = 'output window, operand 0']
    %10 = vsyncpa [#allocation3], 0
    %s11 = scalar_lea.sflag [#allocation3], 1
    %12 = vsyncpa %s11, 0
    %13 = vsyncpa [#allocation4], 0
    %s14 = scalar_lea.sflag [#allocation4], 1
    %15 = vsyncpa %s14, 0
    loop: start=0, step=1, limit=4
    $region2: #{tpu_custom_call.1} parent=1 // loop_pre_header
      _
    $region3: #{tpu_custom_call.1} parent=1 // loop_header
      %s17 = sphi 0, %s21
      %p18 = scmp.ge.s32.totalorder %s17, 4
      %s27 = sphi 0, %s29
      %s30 = sphi 0, %s27
      %s31 = sphi 0, %s30
      %s47 = sphi 0, %s31
      %s51 = sphi 0, %s51
      %s53 = sphi 0, %s51
      %s54 = sphi 0, %s53
      %s68 = sphi 0, %s54
      %s72 = sphi 0, %s72
      %s74 = sphi 0, %s72
      %s75 = sphi 0, %s74
      %s89 = sphi 0, %s75
      %s93 = sphi 0, %s93
      %s95 = sphi 0, %s93
      %s96 = sphi 0, %s95
      %s110 = sphi 0, %s96
      %s114 = sphi 0, %s114
      %s116 = sphi 0, %s114
      %s117 = sphi 0, %s116
      %s131 = sphi 0, %s117
      %s137 = sphi 0, %s139
      %s140 = sphi 0, %s137
      %s141 = sphi 0, %s140
      %s157 = sphi 0, %s141
    $region4: #{tpu_custom_call.1} parent=1 // loop_header_branch
      %20 = sbr.rel (%p18) target = $region8
    $region5: #{tpu_custom_call.1} parent=1 // loop_body
      %s22 = ssub.s32 %s17, 1
      %s23 = ssub.s32 %s17, 2
      %s24 = sadd.s32 %s17, 1
      %s25 = ssub.s32 %s17, %s24
      %p26 = scmp.eq.s32.totalorder %s25, 0
      %s28 = sadd.s32 %s27, 1
      %s29 = scalar_select %p26, %s27, %s28
      %p32 = pneg %p26
      %p33 = scmp.eq.s32.totalorder %s17, 1
      %p34 = por %p32, %p33
      %p35 = scmp.ne.s32.totalorder %s27, %s30
      %p36 = scmp.eq.s32.totalorder %s17, 0
      %p37 = por %p35, %p36
      %p38 = scmp.ne.s32.totalorder %s27, %s30
      %p39 = scmp.eq.s32.totalorder %s22, 1
      %p40 = por %p38, %p39
      %p41 = scmp.ne.s32.totalorder %s30, %s31
      %p42 = scmp.eq.s32.totalorder %s22, 0
      %p43 = por %p41, %p42
      %p44 = scmp.ne.s32.totalorder %s30, %s31
      %p45 = scmp.eq.s32.totalorder %s23, 1
      %p46 = por %p44, %p45
      %p48 = scmp.ne.s32.totalorder %s31, %s47
      %p49 = scmp.eq.s32.totalorder %s23, 0
      %p50 = por %p48, %p49
      %s52 = sadd.s32 %s51, 1
      %p55 = scmp.eq.s32.totalorder %s17, 1
      %p56 = scmp.ne.s32.totalorder %s51, %s53
      %p57 = scmp.eq.s32.totalorder %s17, 0
      %p58 = por %p56, %p57
      %p59 = scmp.ne.s32.totalorder %s51, %s53
      %p60 = scmp.eq.s32.totalorder %s22, 1
      %p61 = por %p59, %p60
      %p62 = scmp.ne.s32.totalorder %s53, %s54
      %p63 = scmp.eq.s32.totalorder %s22, 0
      %p64 = por %p62, %p63
      %p65 = scmp.ne.s32.totalorder %s53, %s54
      %p66 = scmp.eq.s32.totalorder %s23, 1
      %p67 = por %p65, %p66
      %p69 = scmp.ne.s32.totalorder %s54, %s68
      %p70 = scmp.eq.s32.totalorder %s23, 0
      %p71 = por %p69, %p70
      %s73 = sadd.s32 %s72, 1
      %p76 = scmp.eq.s32.totalorder %s17, 1
      %p77 = scmp.ne.s32.totalorder %s72, %s74
      %p78 = scmp.eq.s32.totalorder %s17, 0
      %p79 = por %p77, %p78
      %p80 = scmp.ne.s32.totalorder %s72, %s74
      %p81 = scmp.eq.s32.totalorder %s22, 1
      %p82 = por %p80, %p81
      %p83 = scmp.ne.s32.totalorder %s74, %s75
      %p84 = scmp.eq.s32.totalorder %s22, 0
      %p85 = por %p83, %p84
      %p86 = scmp.ne.s32.totalorder %s74, %s75
      %p87 = scmp.eq.s32.totalorder %s23, 1
      %p88 = por %p86, %p87
      %p90 = scmp.ne.s32.totalorder %s75, %s89
      %p91 = scmp.eq.s32.totalorder %s23, 0
      %p92 = por %p90, %p91
      %s94 = sadd.s32 %s93, 1
      %p97 = scmp.eq.s32.totalorder %s17, 1
      %p98 = scmp.ne.s32.totalorder %s93, %s95
      %p99 = scmp.eq.s32.totalorder %s17, 0
      %p100 = por %p98, %p99
      %p101 = scmp.ne.s32.totalorder %s93, %s95
      %p102 = scmp.eq.s32.totalorder %s22, 1
      %p103 = por %p101, %p102
      %p104 = scmp.ne.s32.totalorder %s95, %s96
      %p105 = scmp.eq.s32.totalorder %s22, 0
      %p106 = por %p104, %p105
      %p107 = scmp.ne.s32.totalorder %s95, %s96
      %p108 = scmp.eq.s32.totalorder %s23, 1
      %p109 = por %p107, %p108
      %p111 = scmp.ne.s32.totalorder %s96, %s110
      %p112 = scmp.eq.s32.totalorder %s23, 0
      %p113 = por %p111, %p112
      %s115 = sadd.s32 %s114, 1
      %p118 = scmp.eq.s32.totalorder %s17, 1
      %p119 = scmp.ne.s32.totalorder %s114, %s116
      %p120 = scmp.eq.s32.totalorder %s17, 0
      %p121 = por %p119, %p120
      %p122 = scmp.ne.s32.totalorder %s114, %s116
      %p123 = scmp.eq.s32.totalorder %s22, 1
      %p124 = por %p122, %p123
      %p125 = scmp.ne.s32.totalorder %s116, %s117
      %p126 = scmp.eq.s32.totalorder %s22, 0
      %p127 = por %p125, %p126
      %p128 = scmp.ne.s32.totalorder %s116, %s117
      %p129 = scmp.eq.s32.totalorder %s23, 1
      %p130 = por %p128, %p129
      %p132 = scmp.ne.s32.totalorder %s117, %s131
      %p133 = scmp.eq.s32.totalorder %s23, 0
      %p134 = por %p132, %p133
      %s135 = ssub.s32 %s17, %s24
      %p136 = scmp.eq.s32.totalorder %s135, 0
      %s138 = sadd.s32 %s137, 1
      %s139 = scalar_select %p136, %s137, %s138
      %p142 = pneg %p136
      %p143 = scmp.eq.s32.totalorder %s17, 1
      %p144 = por %p142, %p143
      %p145 = scmp.ne.s32.totalorder %s137, %s140
      %p146 = scmp.eq.s32.totalorder %s17, 0
      %p147 = por %p145, %p146
      %p148 = scmp.ne.s32.totalorder %s137, %s140
      %p149 = scmp.eq.s32.totalorder %s22, 1
      %p150 = por %p148, %p149
      %p151 = scmp.ne.s32.totalorder %s140, %s141
      %p152 = scmp.eq.s32.totalorder %s22, 0
      %p153 = por %p151, %p152
      %p154 = scmp.ne.s32.totalorder %s140, %s141
      %p155 = scmp.eq.s32.totalorder %s23, 1
      %p156 = por %p154, %p155
      %p158 = scmp.ne.s32.totalorder %s141, %s157
      %p159 = scmp.eq.s32.totalorder %s23, 0
      %p160 = por %p158, %p159
      %p161 = scmp.le.s32.totalorder 1, %s17
      %p162 = scmp.lt.s32.totalorder %s17, 3
      %p163 = pnand %p161, %p162
      %p164 = pneg %p163
      // Predicated region
      $region9: #{tpu_custom_call.1} parent=5 // pred_check
        _
      $region10: #{tpu_custom_call.1} parent=5 // pred_check_branch
        %166 = sbr.rel (%p163) target = $region12
      $region11: #{tpu_custom_call.1} parent=5 // pred_region
        %s167 = ssub.s32 %s17, 1
        // Predicated region
        $region13: #{tpu_custom_call.1} parent=11 // pred_check
          %p168 = pneg %p64
        $region14: #{tpu_custom_call.1} parent=11 // pred_check_branch
          %170 = sbr.rel (%p168) target = $region16
        $region15: #{tpu_custom_call.1} parent=11 // pred_region
          _
        $region16: #{tpu_custom_call.1} parent=11 // pred_fallthru
          _
        // Predicated region
        $region17: #{tpu_custom_call.1} parent=11 // pred_check
          %p171 = pneg %p85
        $region18: #{tpu_custom_call.1} parent=11 // pred_check_branch
          %173 = sbr.rel (%p171) target = $region20
        $region19: #{tpu_custom_call.1} parent=11 // pred_region
          _
        $region20: #{tpu_custom_call.1} parent=11 // pred_fallthru
          _
        // Predicated region
        $region21: #{tpu_custom_call.1} parent=11 // pred_check
          %p174 = pneg %p106
        $region22: #{tpu_custom_call.1} parent=11 // pred_check_branch
          %176 = sbr.rel (%p174) target = $region24
        $region23: #{tpu_custom_call.1} parent=11 // pred_region
          _
        $region24: #{tpu_custom_call.1} parent=11 // pred_fallthru
          _
        // Predicated region
        $region25: #{tpu_custom_call.1} parent=11 // pred_check
          %p177 = pneg %p127
        $region26: #{tpu_custom_call.1} parent=11 // pred_check_branch
          %179 = sbr.rel (%p177) target = $region28
        $region27: #{tpu_custom_call.1} parent=11 // pred_region
          _
        $region28: #{tpu_custom_call.1} parent=11 // pred_fallthru
          _
      $region12: #{tpu_custom_call.1} parent=5 // pred_fallthru
        _
      %p180 = scmp.lt.s32.totalorder %s17, 2
      // Predicated region
      $region29: #{tpu_custom_call.1} parent=5 // pred_check
        %p181 = pneg %p180
      $region30: #{tpu_custom_call.1} parent=5 // pred_check_branch
        %183 = sbr.rel (%p181) target = $region32
      $region31: #{tpu_custom_call.1} parent=5 // pred_region
        // Predicated region
        $region33: #{tpu_custom_call.1} parent=31 // pred_check
          %p184 = pneg %p37
        $region34: #{tpu_custom_call.1} parent=31 // pred_check_branch
          %186 = sbr.rel (%p184) target = $region36
        $region35: #{tpu_custom_call.1} parent=31 // pred_region
          %s187 = sand.u32 %s27, 1
          %s188 = scalar_lea.sflag [#allocation3], %s187
          %s189 = sand.u32 %s27, 1
          %s190 = smul.addr %s189, 64
          %s191 = scalar_lea.vmem [#allocation2], %s190
          %s193 = ssub.s32 1024, 1024
          %194 = vsyncadd %s188, %s193
          %s195 = smul.addr %s17, 8
          %s196 = smul.addr %s195, 128
          %s197 = scalar_lea.hbm %s0, %s196
          %s198 = sshll.u32 %s191, 4
          %s199 = int_to_ptr.vmem [resolvable:$true] %s198
          %204 = dma.hbm_to_vmem [thread:$0]  %s197, 1024, %s199, %s188, 256, 256, 16
        $region36: #{tpu_custom_call.1} parent=31 // pred_fallthru
          _
      $region32: #{tpu_custom_call.1} parent=5 // pred_fallthru
        _
      %p205 = scmp.le.s32.totalorder 1, %s17
      %p206 = scmp.lt.s32.totalorder %s17, 3
      %p207 = pnand %p205, %p206
      %p208 = pneg %p207
      // Predicated region
      $region37: #{tpu_custom_call.1} parent=5 // pred_check
        _
      $region38: #{tpu_custom_call.1} parent=5 // pred_check_branch
        %210 = sbr.rel (%p207) target = $region40
      $region39: #{tpu_custom_call.1} parent=5 // pred_region
        %s211 = ssub.s32 %s17, 1
        %s212 = sand.u32 %s30, 1
        %s213 = scalar_lea.sflag [#allocation3], %s212
        %s214 = sand.u32 %s30, 1
        %s215 = smul.addr %s214, 64
        %s216 = scalar_lea.vmem [#allocation2], %s215
        // Predicated region
        $region41: #{tpu_custom_call.1} parent=39 // pred_check
          %p217 = pneg %p43
        $region42: #{tpu_custom_call.1} parent=39 // pred_check_branch
          %219 = sbr.rel (%p217) target = $region44
        $region43: #{tpu_custom_call.1} parent=39 // pred_region
          %220 = dma.done %s213, 1024
        $region44: #{tpu_custom_call.1} parent=39 // pred_fallthru
          _
        %s221 = sand.u32 %s30, 1
        %s222 = scalar_lea.sflag [#allocation3], %s221
        %s223 = sand.u32 %s30, 1
        %s224 = smul.addr %s223, 64
        %s225 = scalar_lea.vmem [#allocation2], %s224
        %p226 = pneg %p43
        %p227 = pneg %p40
        %p228 = pneg %p64
        %p229 = pneg %p61
        %p230 = pneg %p85
        %p231 = pneg %p82
        %p232 = pneg %p106
        %p233 = pneg %p103
        %p234 = pneg %p127
        %p235 = pneg %p124
        %p236 = pneg %p153
        %p237 = pneg %p150
        %s238 = sand.u32 %s140, 1
        %s239 = scalar_lea.sflag [#allocation4], %s238
        %s240 = sand.u32 %s140, 1
        %s241 = smul.addr %s240, 64
        %s242 = scalar_lea.vmem [#allocation5], %s241
        %v243 = vld [vmem:[%s216] sm:$0xff]
        %v244 = vld [vmem:[%s216 + $0x8] sm:$0xff]
        %v245 = vld [vmem:[%s216 + $0x10] sm:$0xff]
        %v246 = vld [vmem:[%s216 + $0x18] sm:$0xff]
        %v247 = vld [vmem:[%s216 + $0x20] sm:$0xff]
        %v248 = vld [vmem:[%s216 + $0x28] sm:$0xff]
        %v249 = vld [vmem:[%s216 + $0x30] sm:$0xff]
        %v250 = vld [vmem:[%s216 + $0x38] sm:$0xff]
        %v251 = vadd.f32 %v243, %v244
        %252 = vadd.xlane.f32.xlu0 %v251
        %v253 = vpop.xlane.xlu0 %252
        %v254 = vadd.f32 %v245, %v246
        %255 = vadd.xlane.f32.xlu0 %v254
        %v256 = vpop.xlane.xlu0 %255
        %v257 = vadd.f32 %v247, %v248
        %258 = vadd.xlane.f32.xlu0 %v257
        %v259 = vpop.xlane.xlu0 %258
        %v260 = vadd.f32 %v249, %v250
        %261 = vadd.xlane.f32.xlu0 %v260
        %v262 = vpop.xlane.xlu0 %261
        %v263 = vrcp.pop 256.0
        %v264 = vmul.f32 %v253, %v263
        %v265 = vmul.f32 %v256, %v263
        %v266 = vmul.f32 %v259, %v263
        %v267 = vmul.f32 %v262, %v263
        %v268 = vld [vmem:[%s1] sm:$0xff]
        %v269 = vld [vmem:[%s1 + $0x8] sm:$0xff]
        %v270 = vld [vmem:[%s1 + $0x10] sm:$0xff]
        %v271 = vld [vmem:[%s1 + $0x18] sm:$0xff]
        %v272 = vld [vmem:[%s2] sm:$0x1]
        %v277 = vlaneseq
        %v278 = vand.u32 %v277, 127
        %v279 = vlaneseq
        %v280 = vshrl.u32 %v279, 7
        %v281 = vsub.s32 %v278, %v280
        %v282 = vrot.slane %v264, %v281
        %v283 = vadd.s32 %v278, 4294967288
        %v284 = vlaneseq
        %v285 = vshrl.u32 %v284, 7
        %v286 = vsub.s32 %v283, %v285
        %v287 = vrot.slane %v265, %v286
        %vm288 = vcmask 130112
        %v289 = vsel %vm288, %v287, %v282
        %v290 = vadd.s32 %v278, 4294967280
        %v291 = vlaneseq
        %v292 = vshrl.u32 %v291, 7
        %v293 = vsub.s32 %v290, %v292
        %v294 = vrot.slane %v266, %v293
        %vm295 = vcmask 195712
        %v296 = vsel %vm295, %v294, %v289
        %v297 = vadd.s32 %v278, 4294967272
        %v298 = vlaneseq
        %v299 = vshrl.u32 %v298, 7
        %v300 = vsub.s32 %v297, %v299
        %v301 = vrot.slane %v267, %v300
        %vm302 = vcmask 261312
        %v303 = vsel %vm302, %v301, %v296
        %vm304 = vcmask 261120
        %v305 = vsel %vm304, %v303, 0
        %307 = vmatprep.subr.mxu0 0.0
        %308 = vmatpush1.msra.mxu0 %v268
        %309 = vmatprep.subr.mxu0 0.0
        %310 = vmatpush1.msra.mxu0 %v269
        %311 = vmatprep.subr.mxu0 0.0
        %312 = vmatpush1.msra.mxu0 %v270
        %313 = vmatprep.subr.mxu0 0.0
        %314 = vmatpush1.msra.mxu0 %v271
        %315 = vmatprep.subr.mxu0 0.0
        %316 = vmatpush1.msra.mxu0 0.0
        %317 = vmatprep.subr.mxu0 0.0
        %318 = vmatpush1.msra.mxu0 0.0
        %319 = vmatprep.subr.mxu0 0.0
        %320 = vmatpush1.msra.mxu0 0.0
        %321 = vmatprep.subr.mxu0 0.0
        %322 = vmatpush1.msra.mxu0 0.0
        %323 = vmatprep.subr.mxu0 0.0
        %324 = vmatpush1.msra.mxu0 0.0
        %325 = vmatprep.subr.mxu0 0.0
        %326 = vmatpush1.msra.mxu0 0.0
        %327 = vmatprep.subr.mxu0 0.0
        %328 = vmatpush1.msra.mxu0 0.0
        %329 = vmatprep.subr.mxu0 0.0
        %330 = vmatpush1.msra.mxu0 0.0
        %331 = vmatprep.subr.mxu0 0.0
        %332 = vmatpush1.msra.mxu0 0.0
        %333 = vmatprep.subr.mxu0 0.0
        %334 = vmatpush1.msra.mxu0 0.0
        %335 = vmatprep.subr.mxu0 0.0
        %336 = vmatpush1.msra.mxu0 0.0
        %337 = vmatprep.subr.mxu0 0.0
        %338 = vmatpush1.msra.mxu0 0.0
        %339 = vmatprep.subr.mxu0 0.0
        %340 = vmatpush1.msra.mxu0 0.0
        %341 = vmatprep.subr.mxu0 0.0
        %342 = vmatpush1.msra.mxu0 0.0
        %343 = vmatprep.subr.mxu0 0.0
        %344 = vmatpush1.msra.mxu0 0.0
        %345 = vmatprep.subr.mxu0 0.0
        %346 = vmatpush1.msra.mxu0 0.0
        %347 = vmatprep.subr.mxu0 0.0
        %348 = vmatpush1.msra.mxu0 0.0
        %349 = vmatprep.subr.mxu0 0.0
        %350 = vmatpush1.msra.mxu0 0.0
        %351 = vmatprep.subr.mxu0 0.0
        %352 = vmatpush1.msra.mxu0 0.0
        %353 = vmatprep.subr.mxu0 0.0
        %354 = vmatpush1.msra.mxu0 0.0
        %355 = vmatprep.subr.mxu0 0.0
        %356 = vmatpush1.msra.mxu0 0.0
        %357 = vmatprep.subr.mxu0 0.0
        %358 = vmatpush1.msra.mxu0 0.0
        %359 = vmatprep.subr.mxu0 0.0
        %360 = vmatpush1.msra.mxu0 0.0
        %361 = vmatprep.subr.mxu0 0.0
        %362 = vmatpush1.msra.mxu0 0.0
        %363 = vmatprep.subr.mxu0 0.0
        %364 = vmatpush1.msra.mxu0 0.0
        %365 = vmatprep.subr.mxu0 0.0
        %366 = vmatpush1.msra.mxu0 0.0
        %367 = vmatprep.subr.mxu0 0.0
        %368 = vmatpush1.msra.mxu0 0.0
        %369 = vmatprep.subr.mxu0 0.0
        %370 = vmatpush1.msra.mxu0 0.0
        %371 = vmatprep.mubr.f32.mxu0 0.0
        %372 = vmatmul.mubr.f32.gmra.mrb[0].mxu0 %v305
        %v373 = vpop.f32.mrb[0].mxu0
        %v374 = vadd.f32 %v272, %v373
        %v375 = vpop.f32.mrb[0].mxu0
        %376 = vdwg.mxu0
        %v377 = vmax.f32 %v374, 0.0
        %v378 = vld [vmem:[%s3] sm:$0x3]
        %v379 = vld [vmem:[%s4] sm:$0x1]
        %vm380 = vcmask 15360
        %v382 = vsel %vm380, %v377, 0
        %vm384 = vcmask 1041408
        %v386 = vsel %vm384, %v378, 0
        %388 = vmatprep.subr.mxu0 0.0
        %389 = vmatpush1.msra.mxu0 %v386
        %390 = vmatprep.subr.mxu0 0.0
        %391 = vmatpush1.msra.mxu0 0.0
        %392 = vmatprep.subr.mxu0 0.0
        %393 = vmatpush1.msra.mxu0 0.0
        %394 = vmatprep.subr.mxu0 0.0
        %395 = vmatpush1.msra.mxu0 0.0
        %396 = vmatprep.subr.mxu0 0.0
        %397 = vmatpush1.msra.mxu0 0.0
        %398 = vmatprep.subr.mxu0 0.0
        %399 = vmatpush1.msra.mxu0 0.0
        %400 = vmatprep.subr.mxu0 0.0
        %401 = vmatpush1.msra.mxu0 0.0
        %402 = vmatprep.subr.mxu0 0.0
        %403 = vmatpush1.msra.mxu0 0.0
        %404 = vmatprep.subr.mxu0 0.0
        %405 = vmatpush1.msra.mxu0 0.0
        %406 = vmatprep.subr.mxu0 0.0
        %407 = vmatpush1.msra.mxu0 0.0
        %408 = vmatprep.subr.mxu0 0.0
        %409 = vmatpush1.msra.mxu0 0.0
        %410 = vmatprep.subr.mxu0 0.0
        %411 = vmatpush1.msra.mxu0 0.0
        %412 = vmatprep.subr.mxu0 0.0
        %413 = vmatpush1.msra.mxu0 0.0
        %414 = vmatprep.subr.mxu0 0.0
        %415 = vmatpush1.msra.mxu0 0.0
        %416 = vmatprep.subr.mxu0 0.0
        %417 = vmatpush1.msra.mxu0 0.0
        %418 = vmatprep.subr.mxu0 0.0
        %419 = vmatpush1.msra.mxu0 0.0
        %420 = vmatprep.subr.mxu0 0.0
        %421 = vmatpush1.msra.mxu0 0.0
        %422 = vmatprep.subr.mxu0 0.0
        %423 = vmatpush1.msra.mxu0 0.0
        %424 = vmatprep.subr.mxu0 0.0
        %425 = vmatpush1.msra.mxu0 0.0
        %426 = vmatprep.subr.mxu0 0.0
        %427 = vmatpush1.msra.mxu0 0.0
        %428 = vmatprep.subr.mxu0 0.0
        %429 = vmatpush1.msra.mxu0 0.0
        %430 = vmatprep.subr.mxu0 0.0
        %431 = vmatpush1.msra.mxu0 0.0
        %432 = vmatprep.subr.mxu0 0.0
        %433 = vmatpush1.msra.mxu0 0.0
        %434 = vmatprep.subr.mxu0 0.0
        %435 = vmatpush1.msra.mxu0 0.0
        %436 = vmatprep.subr.mxu0 0.0
        %437 = vmatpush1.msra.mxu0 0.0
        %438 = vmatprep.subr.mxu0 0.0
        %439 = vmatpush1.msra.mxu0 0.0
        %440 = vmatprep.subr.mxu0 0.0
        %441 = vmatpush1.msra.mxu0 0.0
        %442 = vmatprep.subr.mxu0 0.0
        %443 = vmatpush1.msra.mxu0 0.0
        %444 = vmatprep.subr.mxu0 0.0
        %445 = vmatpush1.msra.mxu0 0.0
        %446 = vmatprep.subr.mxu0 0.0
        %447 = vmatpush1.msra.mxu0 0.0
        %448 = vmatprep.subr.mxu0 0.0
        %449 = vmatpush1.msra.mxu0 0.0
        %450 = vmatprep.subr.mxu0 0.0
        %451 = vmatpush1.msra.mxu0 0.0
        %452 = vmatprep.mubr.f32.mxu0 0.0
        %453 = vmatmul.mubr.f32.gmra.mrb[0].mxu0 %v382
        %v454 = vpop.f32.mrb[0].mxu0
        %v455 = vadd.f32 %v379, %v454
        %v456 = vpop.f32.mrb[0].mxu0
        %457 = vdwg.mxu0
        %v458 = vxor.u32 %v455, 2147483648
        %v459 = vmul.f32 %v458, 1.442695
        %v460 = vpow.pop %v459
        %v461 = vadd.f32 %v460, 1.0
        %v462 = vrcp.pop %v461
        %v463 = vmul.f32 1.0, %v462
        %v464 = vlaneseq
        %v465 = vshrl.u32 %v464, 7
        %v466 = vsub.s32 0, %v465
        %v467 = vrot.slane %v463, %v466
        %469 = vbcast.lane.b32.xlu0 %v467, 256
        %v470 = vpop.permute.xlu0 %469
        %s472 = sor.u32 256, 8
        %473 = vbcast.lane.b32.xlu0 %v467, %s472
        %v474 = vpop.permute.xlu0 %473
        %s476 = sor.u32 256, 16
        %477 = vbcast.lane.b32.xlu0 %v467, %s476
        %v478 = vpop.permute.xlu0 %477
        %s480 = sor.u32 256, 24
        %481 = vbcast.lane.b32.xlu0 %v467, %s480
        %v482 = vpop.permute.xlu0 %481
        %v483 = vmul.f32 %v243, %v470
        %v484 = vmul.f32 %v244, %v470
        %v485 = vmul.f32 %v245, %v474
        %v486 = vmul.f32 %v246, %v474
        %v487 = vmul.f32 %v247, %v478
        %v488 = vmul.f32 %v248, %v478
        %v489 = vmul.f32 %v249, %v482
        %v490 = vmul.f32 %v250, %v482
        %491 = vst [vmem:[%s242] sm:$0xff] %v483
        %492 = vst [vmem:[%s242 + $0x8] sm:$0xff] %v484
        %493 = vst [vmem:[%s242 + $0x10] sm:$0xff] %v485
        %494 = vst [vmem:[%s242 + $0x18] sm:$0xff] %v486
        %495 = vst [vmem:[%s242 + $0x20] sm:$0xff] %v487
        %496 = vst [vmem:[%s242 + $0x28] sm:$0xff] %v488
        %497 = vst [vmem:[%s242 + $0x30] sm:$0xff] %v489
        %498 = vst [vmem:[%s242 + $0x38] sm:$0xff] %v490
        %s499 = sand.u32 %s140, 1
        %s500 = scalar_lea.sflag [#allocation4], %s499
        %s501 = sand.u32 %s140, 1
        %s502 = smul.addr %s501, 64
        %s503 = scalar_lea.vmem [#allocation5], %s502
        // Predicated region
        $region45: #{tpu_custom_call.1} parent=39 // pred_check
          %p504 = pneg %p150
        $region46: #{tpu_custom_call.1} parent=39 // pred_check_branch
          %506 = sbr.rel (%p504) target = $region48
        $region47: #{tpu_custom_call.1} parent=39 // pred_region
          %s508 = ssub.s32 1024, 1024
          %509 = vsyncadd %s500, %s508
          %s510 = smul.addr %s22, 8
          %s511 = smul.addr %s510, 128
          %s512 = scalar_lea.hbm %s5, %s511
          %s513 = sshll.u32 %s503, 4
          %s514 = int_to_ptr.vmem [resolvable:$true] %s513
          %519 = dma.vmem_to_hbm [thread:$0]  %s514, 1024, %s512, %s500, 256, 256, 16
        $region48: #{tpu_custom_call.1} parent=39 // pred_fallthru
          _
      $region40: #{tpu_custom_call.1} parent=5 // pred_fallthru
        _
      %p520 = scmp.le.s32.totalorder 2, %s17
      // Predicated region
      $region49: #{tpu_custom_call.1} parent=5 // pred_check
        %p521 = pneg %p520
      $region50: #{tpu_custom_call.1} parent=5 // pred_check_branch
        %523 = sbr.rel (%p521) target = $region52
      $region51: #{tpu_custom_call.1} parent=5 // pred_region
        %s524 = ssub.s32 %s17, 2
        // Predicated region
        $region53: #{tpu_custom_call.1} parent=51 // pred_check
          %p525 = pneg %p156
        $region54: #{tpu_custom_call.1} parent=51 // pred_check_branch
          %527 = sbr.rel (%p525) target = $region56
        $region55: #{tpu_custom_call.1} parent=51 // pred_region
          %s528 = sand.u32 %s141, 1
          %s529 = scalar_lea.sflag [#allocation4], %s528
          %s530 = sand.u32 %s141, 1
          %s531 = smul.addr %s530, 64
          %s532 = scalar_lea.vmem [#allocation5], %s531
          %533 = dma.done %s529, 1024
        $region56: #{tpu_custom_call.1} parent=51 // pred_fallthru
          _
      $region52: #{tpu_custom_call.1} parent=5 // pred_fallthru
        _
    $region6: #{tpu_custom_call.1} parent=1 // loop_footer
      %s21 = sadd.s32 1, %s17
    $region7: #{tpu_custom_call.1} parent=1 // loop_footer_branch
      %16 = sbr.rel target = $region3
    $region8: #{tpu_custom_call.1} parent=1 // loop_exit
      _
    %534 = vsyncpa [#allocation3], 1
    %s535 = scalar_lea.sflag [#allocation3], 1
    %536 = vsyncpa %s535, 1
    %537 = vsyncpa [#allocation4], 1
    %s538 = scalar_lea.sflag [#allocation4], 1
    %539 = vsyncpa %s538, 1

</llo_original>
